<compile_context>
chip_gen: v6e
topology: v6e:2x2x1
jax: 0.10.0
libtpu: 0.0.40
codegen_flags: <defaults>
</compile_context>

<pallas_src>
import math

import jax
import jax.numpy as jnp
from jax.experimental import pallas as pl
from jax.experimental.pallas import tpu as pltpu

_HIDDEN = 128
_TARGET_TB = 512          # target batch tile (rows); multiple of 8
_X_VMEM_BUDGET = 24 << 20  # budget for the f32 x double-buffer


def _round_up(x, m):
    return ((x + m - 1) // m) * m


def _choose_tb(B, D, target=_TARGET_TB):
    """Pick the batch tile: big enough to amortize per-step overhead, small
    enough to fit VMEM, and capped so the grid has >= 2 tiles (v7x megacore)."""
    max_tb = max(8, (_X_VMEM_BUDGET // (2 * D * 4)) // 8 * 8)
    tb = min(target, max_tb)
    if B > 2 * 8:
        # keep at least two grid tiles so both v7x TensorCores get work
        tb = min(tb, max(8, _round_up(pl.cdiv(B, 2), 8)))
    if B <= tb:
        # single block whose shape equals the full array dims (always legal)
        return B
    return tb


def _attn_weights_kernel(x_ref, w1_ref, b1_ref, w2_ref, b2_ref, nvalid_ref, out_ref):
    # x_ref     : (TB, D)     f32  VMEM  (batch tile, pipelined over the grid)
    # w1_ref    : (D, 128)    bf16 VMEM  (resident: constant index_map)
    # b1_ref    : (1, 128)    f32  VMEM
    # w2_ref    : (1, 128)    f32  VMEM  (fc2 weight as a lane-dense row)
    # b2_ref    : (1,)        f32  SMEM  (scalar bias)
    # nvalid_ref: (1,)        i32  SMEM  (number of valid batch rows = B)
    # out_ref   : (1, 1, TB)  f32  VMEM  (lane-dense output row)
    tb = out_ref.shape[-1]

    # fc1 on the MXU: cast the tile to bf16 in VMEM (no extra HBM copy),
    # f32 accumulation; bias + ReLU in f32 on the VPU.
    x_bf16 = x_ref[...].astype(jnp.bfloat16)
    h = jnp.dot(x_bf16, w1_ref[...], preferred_element_type=jnp.float32)
    h = jnp.maximum(h + b1_ref[...], 0.0)                      # (TB, 128) f32

    # fc2 as VPU multiply + XLU cross-lane reduce (avoids an N=1 MXU matmul).
    o = jnp.sum(h * w2_ref[...], axis=-1) + b2_ref[0]          # (TB,)
    p = jax.nn.sigmoid(o).reshape(1, 1, tb)

    # Mask garbage tail rows of a ragged last tile (they're sliced off in the
    # wrapper anyway; masking keeps the output NaN-free).
    row = pl.program_id(0) * tb + jax.lax.broadcasted_iota(jnp.int32, (1, 1, tb), 2)
    out_ref[...] = jnp.where(row < nvalid_ref[0], p, 0.0)


def attention_weights_forward(x_nchw, w1, b1, w2, b2, *, tb=None):
    """Pallas forward pass.

    x_nchw: (B, C, H, W) float32
    w1: (in_dim, 128), b1: (128,), w2: (128, 1), b2: (1,)   (transposed vs. PyTorch)
    Returns (probs (B, 1) float32, sorted_indices (B, 1) int32).
    """
    B = x_nchw.shape[0]
    x_flat = x_nchw.reshape(B, -1)          # view-like reshape, no HBM copy
    D = x_flat.shape[1]

    if tb is None:
        tb = _choose_tb(B, D)
    g = pl.cdiv(B, tb)

    # Small, read-once parameters; W1 in bf16 for the MXU, rest f32.
    w1_bf16 = w1.astype(jnp.bfloat16)
    b1_row = b1.reshape(1, _HIDDEN).astype(jnp.float32)
    w2_row = w2.reshape(1, _HIDDEN).astype(jnp.float32)   # (128,1) -> (1,128) row
    b2_s = b2.reshape(1).astype(jnp.float32)
    nvalid = jnp.array([B], dtype=jnp.int32)

    # VMEM need: f32 x double-buffer + bf16 W1 (+ small constants / output).
    vmem_need = (2 * tb * D * 4) + (2 * D * _HIDDEN * 2) + (2 * tb * 4) + (1 << 20)
    vmem_limit = int(min(max(2 * vmem_need, 32 << 20), 48 << 20))

    cost = pl.CostEstimate(
        flops=2 * g * tb * D * _HIDDEN + 3 * g * tb * _HIDDEN,
        transcendentals=g * tb,  # one sigmoid per row
        bytes_accessed=(B * D * 4 + D * _HIDDEN * 2
                        + 3 * _HIDDEN * 4 + g * tb * 4),
    )

    out = pl.pallas_call(
        _attn_weights_kernel,
        out_shape=jax.ShapeDtypeStruct((g, 1, tb), jnp.float32),
        grid_spec=pltpu.PrefetchScalarGridSpec(
            num_scalar_prefetch=0,
            grid=(g,),
            in_specs=[
                pl.BlockSpec((tb, D), lambda i: (i, 0)),            # x tile (f32)
                pl.BlockSpec((D, _HIDDEN), lambda i: (0, 0)),       # W1 (resident)
                pl.BlockSpec((1, _HIDDEN), lambda i: (0, 0)),       # b1 row
                pl.BlockSpec((1, _HIDDEN), lambda i: (0, 0)),       # w2 row
                pl.BlockSpec(memory_space=pltpu.MemorySpace.SMEM),  # b2 scalar
                pl.BlockSpec(memory_space=pltpu.MemorySpace.SMEM),  # n valid rows
            ],
            out_specs=pl.BlockSpec((1, 1, tb), lambda i: (i, 0, 0)),
        ),
        compiler_params=pltpu.CompilerParams(
            dimension_semantics=("parallel",),   # shard batch tiles across TCs (v7x)
            vmem_limit_bytes=vmem_limit,
        ),
        cost_estimate=cost,
    )(x_flat, w1_bf16, b1_row, w2_row, b2_s, nvalid)
    # TODO(synk): for extremely large in_dim (D) on v7x, add a K-tiled grid axis
    # ("arbitrary", last) with an f32 accumulator scratch instead of shrinking
    # the batch tile via the VMEM budget.

    probs = out.reshape(-1)[:B].reshape(B, 1)
    # torch.argsort over the length-1 last axis is provably all zeros.
    sorted_indices = jnp.zeros((B, 1), dtype=jnp.int32)
    return probs, sorted_indices


def init_params(key, in_dim, hidden=_HIDDEN):
    """Deterministic init mimicking nn.Linear's uniform(-1/sqrt(fan_in), 1/sqrt(fan_in))."""
    k1, k2, k3, k4 = jax.random.split(key, 4)
    bound1 = 1.0 / math.sqrt(in_dim)
    bound2 = 1.0 / math.sqrt(hidden)
    w1 = jax.random.uniform(k1, (in_dim, hidden), jnp.float32, -bound1, bound1)
    b1 = jax.random.uniform(k2, (hidden,), jnp.float32, -bound1, bound1)
    w2 = jax.random.uniform(k3, (hidden, 1), jnp.float32, -bound2, bound2)
    b2 = jax.random.uniform(k4, (1,), jnp.float32, -bound2, bound2)
    return w1, b1, w2, b2


if __name__ == "__main__":
    key = jax.random.PRNGKey(0)
    kx, kp = jax.random.split(key)

    # Small NCHW input; in_dim = C*H*W = 4*16*16 = 1024.
    B, C, H, W = 2, 4, 16, 16
    x = jax.random.normal(kx, (B, C, H, W), jnp.float32)
    w1, b1, w2, b2 = init_params(kp, in_dim=C * H * W)

    probs, sorted_idx = attention_weights_forward(x, w1, b1, w2, b2)
    jax.block_until_ready((probs, sorted_idx))

    # Reference in plain JAX (same bf16 matmul operands / f32 accumulation).
    xf = x.reshape(B, -1)
    h_ref = jnp.maximum(
        jnp.dot(xf.astype(jnp.bfloat16), w1.astype(jnp.bfloat16),
                preferred_element_type=jnp.float32) + b1, 0.0)
    ref = jax.nn.sigmoid(h_ref @ w2 + b2)

    assert probs.shape == (B, 1)
    assert sorted_idx.shape == (B, 1)
    assert jnp.allclose(probs, ref, atol=2e-3, rtol=2e-3), (
        "max abs err = %g" % float(jnp.max(jnp.abs(probs - ref))))
    assert jnp.all(sorted_idx == 0)

    print("KERNEL_OK")
</pallas_src>

<mosaic_0001>
module attributes {stable_mosaic.version = 11 : i64} {
  func.func @_attn_weights_kernel(%arg0: i32, %arg1: memref<2x1024xf32, #tpu.memory_space<vmem>>, %arg2: memref<1024x128xbf16, #tpu.memory_space<vmem>>, %arg3: memref<1x128xf32, #tpu.memory_space<vmem>>, %arg4: memref<1x128xf32, #tpu.memory_space<vmem>>, %arg5: memref<1xf32, #tpu.memory_space<smem>>, %arg6: memref<1xi32, #tpu.memory_space<smem>>, %arg7: memref<1x1x2xf32, #tpu.memory_space<vmem>>) attributes {dimension_semantics = [#tpu.dimension_semantics<parallel>], iteration_bounds = array<i64: 1>, scalar_prefetch = 0 : i64, scratch_operands = 0 : i64, tpu.core_type = #tpu.core_type<tc>, window_params = [{transform_indices = @transform_0, window_bounds = array<i64: 2, 1024>}, {pipeline_mode = #tpu.pipeline_mode<synchronous>, transform_indices = @transform_1, window_bounds = array<i64: 1024, 128>}, {pipeline_mode = #tpu.pipeline_mode<synchronous>, transform_indices = @transform_2, window_bounds = array<i64: 1, 128>}, {pipeline_mode = #tpu.pipeline_mode<synchronous>, transform_indices = @transform_3, window_bounds = array<i64: 1, 128>}, {transform_indices = @transform_4, window_bounds = array<i64: 1>}, {transform_indices = @transform_5, window_bounds = array<i64: 1>}, {transform_indices = @transform_6, window_bounds = array<i64: 1, 1, 2>}]} {
    %c0 = arith.constant 0 : index
    %c0_0 = arith.constant 0 : index
    %0 = vector.load %arg1[%c0, %c0_0] : memref<2x1024xf32, #tpu.memory_space<vmem>>, vector<2x1024xf32>
    %1 = arith.truncf %0 : vector<2x1024xf32> to vector<2x1024xbf16>
    %c0_1 = arith.constant 0 : index
    %c0_2 = arith.constant 0 : index
    %2 = vector.load %arg2[%c0_1, %c0_2] : memref<1024x128xbf16, #tpu.memory_space<vmem>>, vector<1024x128xbf16>
    %cst = arith.constant dense<0.000000e+00> : vector<2x128xf32>
    %3 = tpu.matmul %1, %2, %cst {dimension_numbers = #tpu.dot_dimension_numbers<[1], [0], [0], [1], [0, 0, 1, 1], [], []>} : vector<2x1024xbf16>, vector<1024x128xbf16>, vector<2x128xf32> -> vector<2x128xf32>
    %c0_3 = arith.constant 0 : index
    %c0_4 = arith.constant 0 : index
    %4 = vector.load %arg3[%c0_3, %c0_4] : memref<1x128xf32, #tpu.memory_space<vmem>>, vector<1x128xf32>
    %5 = vector.broadcast %4 : vector<1x128xf32> to vector<2x128xf32>
    %6 = arith.addf %3, %5 : vector<2x128xf32>
    %cst_5 = arith.constant 0.000000e+00 : f32
    %7 = vector.broadcast %cst_5 : f32 to vector<2x128xf32>
    %8 = arith.maximumf %6, %7 : vector<2x128xf32>
    %c0_6 = arith.constant 0 : index
    %c0_7 = arith.constant 0 : index
    %9 = vector.load %arg4[%c0_6, %c0_7] : memref<1x128xf32, #tpu.memory_space<vmem>>, vector<1x128xf32>
    %10 = vector.broadcast %9 : vector<1x128xf32> to vector<2x128xf32>
    %11 = arith.mulf %8, %10 : vector<2x128xf32>
    %cst_8 = arith.constant dense<0.000000e+00> : vector<2xf32>
    %12 = vector.multi_reduction <add>, %11, %cst_8 [1] : vector<2x128xf32> to vector<2xf32>
    %c0_9 = arith.constant 0 : index
    %13 = memref.load %arg5[%c0_9] : memref<1xf32, #tpu.memory_space<smem>>
    %14 = vector.broadcast %13 : f32 to vector<2xf32>
    %15 = arith.addf %12, %14 : vector<2xf32>
    %16 = arith.negf %15 : vector<2xf32>
    %17 = math.exp %16 : vector<2xf32>
    %cst_10 = arith.constant 1.000000e+00 : f32
    %18 = vector.broadcast %cst_10 : f32 to vector<2xf32>
    %19 = arith.addf %18, %17 : vector<2xf32>
    %20 = arith.divf %18, %19 : vector<2xf32>
    %21 = vector.shape_cast %20 : vector<2xf32> to vector<1x1x2xf32>
    %c2_i32 = arith.constant 2 : i32
    %22 = arith.muli %arg0, %c2_i32 : i32
    %23 = tpu.iota {dimensions = array<i32: 2>} : vector<1x1x2xi32>
    %24 = vector.broadcast %22 : i32 to vector<1x1x2xi32>
    %25 = arith.addi %24, %23 : vector<1x1x2xi32>
    %c0_11 = arith.constant 0 : index
    %26 = memref.load %arg6[%c0_11] : memref<1xi32, #tpu.memory_space<smem>>
    %27 = vector.broadcast %26 : i32 to vector<1x1x2xi32>
    %28 = arith.cmpi slt, %25, %27 : vector<1x1x2xi32>
    %cst_12 = arith.constant 0.000000e+00 : f32
    %29 = vector.broadcast %cst_12 : f32 to vector<1x1x2xf32>
    %30 = arith.select %28, %21, %29 : vector<1x1x2xi1>, vector<1x1x2xf32>
    %c0_13 = arith.constant 0 : index
    %c0_14 = arith.constant 0 : index
    %c0_15 = arith.constant 0 : index
    %31 = vector.load %arg7[%c0_13, %c0_14, %c0_15] : memref<1x1x2xf32, #tpu.memory_space<vmem>>, vector<1x1x2xf32>
    tpu.vector_store %arg7[%c0_13, %c0_14, %c0_15], %30 {strides = array<i32>} : memref<1x1x2xf32, #tpu.memory_space<vmem>>, vector<1x1x2xf32>,
    return
  }
  func.func @transform_0(%arg0: i32) -> (i32, i32) {
    %c0_i32 = arith.constant 0 : i32
    %c0_i32_0 = arith.constant 0 : i32
    return %arg0, %c0_i32 : i32, i32
  }
  func.func @transform_1(%arg0: i32) -> (i32, i32) {
    %c0_i32 = arith.constant 0 : i32
    %c0_i32_0 = arith.constant 0 : i32
    %c0_i32_1 = arith.constant 0 : i32
    return %c0_i32, %c0_i32_0 : i32, i32
  }
  func.func @transform_2(%arg0: i32) -> (i32, i32) {
    %c0_i32 = arith.constant 0 : i32
    %c0_i32_0 = arith.constant 0 : i32
    %c0_i32_1 = arith.constant 0 : i32
    return %c0_i32, %c0_i32_0 : i32, i32
  }
  func.func @transform_3(%arg0: i32) -> (i32, i32) {
    %c0_i32 = arith.constant 0 : i32
    %c0_i32_0 = arith.constant 0 : i32
    %c0_i32_1 = arith.constant 0 : i32
    return %c0_i32, %c0_i32_0 : i32, i32
  }
  func.func @transform_4(%arg0: i32) -> i32 {
    %c0_i32 = arith.constant 0 : i32
    %c0_i32_0 = arith.constant 0 : i32
    return %c0_i32 : i32
  }
  func.func @transform_5(%arg0: i32) -> i32 {
    %c0_i32 = arith.constant 0 : i32
    %c0_i32_0 = arith.constant 0 : i32
    return %c0_i32 : i32
  }
  func.func @transform_6(%arg0: i32) -> (i32, i32, i32) {
    %c0_i32 = arith.constant 0 : i32
    %c0_i32_0 = arith.constant 0 : i32
    %c0_i32_1 = arith.constant 0 : i32
    return %arg0, %c0_i32, %c0_i32_0 : i32, i32, i32
  }
}

</mosaic_0001>

<llo_original>
// kernel: tpu_custom_call.1
$region0: #{tpu_custom_call.1}
  #allocation0 [shape = 'u32[]', space=smem, size = 0x4, offset = 0x4, fixed_abs, tag = 'smem constant byte address 0x4 - core index']
  #allocation1 [shape = 'u32[144,128]{1,0:T(1,128)}', space=vmem, size = 0x12000, scoped, tag = 'internal scratch']
  #allocation2 [shape = 'f32[1]{0:T(128)S(6)}', space=smem, size = 0x200, scoped, tag = 'scoped memory for tpu_custom_call.1']
  #allocation3 [shape = 's32[1]{0:T(128)S(6)}', space=smem, size = 0x200, scoped, tag = 'scoped memory for tpu_custom_call.1']
  %s0 = inlined_call_operand.hbm [shape: f32[2,1024], index: 0, kind: input, shape index: {}]
  %s1 = inlined_call_operand.hbm [shape: bf16[1024,128], index: 1, kind: input, shape index: {}]
  %s2 = inlined_call_operand.vmem [shape: f32[1,128], index: 2, kind: input, shape index: {}]
  %s3 = inlined_call_operand.vmem [shape: f32[1,128], index: 3, kind: input, shape index: {}]
  %s4 = inlined_call_operand.<no memory space> [shape: f32[1], index: 4, kind: input, shape index: {}]
  %s5 = inlined_call_operand.<no memory space> [shape: s32[1], index: 5, kind: input, shape index: {}]
  %s6 = inlined_call_operand.hbm [shape: f32[1,1,2], index: 6, kind: output, shape index: {}]
  %s7 = sld [smem:[#allocation0]]
  $region42: #{tpu_custom_call.1} parent=0
    _
  %s9 = ssub.s32 1, %s7
  %s10 = scalar_select 0, %s9, %s7
  %11 = sst [smem:[#allocation2]] %s4
  %12 = sst [smem:[#allocation3]] %s5
  $region1: #{tpu_custom_call.1} parent=0
    #allocation4 [shape = 'u8[8192]{0}', space=vmem, size = 0x2000, scoped, tag = 'input window, operand 0, single buffered']
    #allocation5 [shape = 's32[1]{0}', space=sflag, size = 0x4, scoped, tag = 'scoped memory for tpu_custom_call.1']
    #allocation6 [shape = 's32[1]{0}', space=sflag, size = 0x4, scoped, tag = 'scoped memory for tpu_custom_call.1']
    #allocation7 [shape = 'u8[262144]{0}', space=vmem, size = 0x40000, scoped, tag = 'input window, operand 1, single buffered']
    #allocation8 [shape = 's32[1]{0}', space=sflag, size = 0x4, scoped, tag = 'scoped memory for tpu_custom_call.1']
    #allocation9 [shape = 'u8[512]{0}', space=vmem, size = 0x400, scoped, tag = 'output window, operand 0, single buffered']
    %13 = vsyncpa [#allocation5], 0
    %14 = vsyncpa [#allocation8], 0
    %15 = vsyncpa [#allocation6], 0
    // Predicated region
    $region2: #{tpu_custom_call.1} parent=1 // pred_check
      _
    $region3: #{tpu_custom_call.1} parent=1 // pred_check_branch
      %17 = sbr.rel (0) target = $region5
    $region4: #{tpu_custom_call.1} parent=1 // pred_region
      %s19 = ssub.s32 256, 256
      %20 = vsyncadd [#allocation5], %s19
      %s22 = sshll.u32 [#allocation4], 4
      %s23 = int_to_ptr.vmem [resolvable:$true] %s22
      %25 = dma.hbm_to_vmem [thread:$0]  %s0, 256, %s23, [#allocation5]
    $region5: #{tpu_custom_call.1} parent=1 // pred_fallthru
      _
    // Predicated region
    $region6: #{tpu_custom_call.1} parent=1 // pred_check
      _
    $region7: #{tpu_custom_call.1} parent=1 // pred_check_branch
      %27 = sbr.rel (0) target = $region9
    $region8: #{tpu_custom_call.1} parent=1 // pred_region
      %s29 = ssub.s32 8192, 8192
      %30 = vsyncadd [#allocation8], %s29
      %s31 = sshll.u32 [#allocation7], 4
      %s32 = int_to_ptr.vmem [resolvable:$true] %s31
      %37 = dma.hbm_to_vmem [thread:$0]  %s1, 8192, %s32, [#allocation8], 64, 64, 4
    $region9: #{tpu_custom_call.1} parent=1 // pred_fallthru
      _
    // Predicated region
    $region10: #{tpu_custom_call.1} parent=1 // pred_check
      _
    $region11: #{tpu_custom_call.1} parent=1 // pred_check_branch
      %39 = sbr.rel (0) target = $region13
    $region12: #{tpu_custom_call.1} parent=1 // pred_region
      _
    $region13: #{tpu_custom_call.1} parent=1 // pred_fallthru
      _
    // Predicated region
    $region14: #{tpu_custom_call.1} parent=1 // pred_check
      _
    $region15: #{tpu_custom_call.1} parent=1 // pred_check_branch
      %41 = sbr.rel (0) target = $region17
    $region16: #{tpu_custom_call.1} parent=1 // pred_region
      _
    $region17: #{tpu_custom_call.1} parent=1 // pred_fallthru
      _
    // Predicated region
    $region18: #{tpu_custom_call.1} parent=1 // pred_check
      _
    $region19: #{tpu_custom_call.1} parent=1 // pred_check_branch
      %43 = sbr.rel (0) target = $region21
    $region20: #{tpu_custom_call.1} parent=1 // pred_region
      _
    $region21: #{tpu_custom_call.1} parent=1 // pred_fallthru
      _
    // Predicated region
    $region22: #{tpu_custom_call.1} parent=1 // pred_check
      _
    $region23: #{tpu_custom_call.1} parent=1 // pred_check_branch
      %45 = sbr.rel (0) target = $region25
    $region24: #{tpu_custom_call.1} parent=1 // pred_region
      _
    $region25: #{tpu_custom_call.1} parent=1 // pred_fallthru
      _
    // Predicated region
    $region26: #{tpu_custom_call.1} parent=1 // pred_check
      _
    $region27: #{tpu_custom_call.1} parent=1 // pred_check_branch
      %47 = sbr.rel (0) target = $region29
    $region28: #{tpu_custom_call.1} parent=1 // pred_region
      %48 = dma.done [#allocation5], 256
    $region29: #{tpu_custom_call.1} parent=1 // pred_fallthru
      _
    // Predicated region
    $region30: #{tpu_custom_call.1} parent=1 // pred_check
      _
    $region31: #{tpu_custom_call.1} parent=1 // pred_check_branch
      %50 = sbr.rel (0) target = $region33
    $region32: #{tpu_custom_call.1} parent=1 // pred_region
      %51 = dma.done [#allocation8], 8192
    $region33: #{tpu_custom_call.1} parent=1 // pred_fallthru
      _
    %v53 = vld [vmem:[#allocation4] sm:$0xff]
    %v54 = vld [vmem:[#allocation4 + $0x8] sm:$0xff]
    %v57 = vcombine.high %v53, %v53
    %v59 = vunpack.c.l.s4 1983009808
    %v60 = vunpack.c.0.s8 %v59
    %v61 = vlaneseq
    %v62 = vshrl.u32 %v61, 7
    %v63 = vsub.s32 %v60, %v62
    %v64 = vrot.slane %v53, %v63
    %v66 = vunpack.c.l.s4 1983009808
    %v67 = vunpack.c.0.s8 %v66
    %v68 = vlaneseq
    %v69 = vshrl.u32 %v68, 7
    %v70 = vsub.s32 %v67, %v69
    %v71 = vrot.slane %v57, %v70
    %v72 = vcombine.high %v64, %v64
    %v73 = vcombine.high %v71, %v71
    %v74 = vcombine.high %v54, %v54
    %v76 = vunpack.c.l.s4 1983009808
    %v77 = vunpack.c.0.s8 %v76
    %v78 = vlaneseq
    %v79 = vshrl.u32 %v78, 7
    %v80 = vsub.s32 %v77, %v79
    %v81 = vrot.slane %v54, %v80
    %v83 = vunpack.c.l.s4 1983009808
    %v84 = vunpack.c.0.s8 %v83
    %v85 = vlaneseq
    %v86 = vshrl.u32 %v85, 7
    %v87 = vsub.s32 %v84, %v86
    %v88 = vrot.slane %v74, %v87
    %v89 = vcombine.high %v81, %v81
    %v90 = vcombine.high %v88, %v88
    %v99 = vpack.c.bf16 %v64, %v64
    %v100 = vpack.c.bf16 %v72, %v72
    %v101 = vpack.c.bf16 %v71, %v71
    %v102 = vpack.c.bf16 %v73, %v73
    %v103 = vpack.c.bf16 %v81, %v81
    %v104 = vpack.c.bf16 %v89, %v89
    %v105 = vpack.c.bf16 %v88, %v88
    %v106 = vpack.c.bf16 %v90, %v90
    %v107 = vld [vmem:[#allocation7] sm:$0xf]
    %v108 = vld [vmem:[#allocation7 + $0x4] sm:$0xf]
    %v109 = vld [vmem:[#allocation7 + $0x8] sm:$0xf]
    %v110 = vld [vmem:[#allocation7 + $0xc] sm:$0xf]
    %v111 = vld [vmem:[#allocation7 + $0x10] sm:$0xf]
    %v112 = vld [vmem:[#allocation7 + $0x14] sm:$0xf]
    %v113 = vld [vmem:[#allocation7 + $0x18] sm:$0xf]
    %v114 = vld [vmem:[#allocation7 + $0x1c] sm:$0xf]
    %v115 = vld [vmem:[#allocation7 + $0x20] sm:$0xf]
    %v116 = vld [vmem:[#allocation7 + $0x24] sm:$0xf]
    %v117 = vld [vmem:[#allocation7 + $0x28] sm:$0xf]
    %v118 = vld [vmem:[#allocation7 + $0x2c] sm:$0xf]
    %v119 = vld [vmem:[#allocation7 + $0x30] sm:$0xf]
    %v120 = vld [vmem:[#allocation7 + $0x34] sm:$0xf]
    %v121 = vld [vmem:[#allocation7 + $0x38] sm:$0xf]
    %v122 = vld [vmem:[#allocation7 + $0x3c] sm:$0xf]
    %v123 = vld [vmem:[#allocation7 + $0x40] sm:$0xf]
    %v124 = vld [vmem:[#allocation7 + $0x44] sm:$0xf]
    %v125 = vld [vmem:[#allocation7 + $0x48] sm:$0xf]
    %v126 = vld [vmem:[#allocation7 + $0x4c] sm:$0xf]
    %v127 = vld [vmem:[#allocation7 + $0x50] sm:$0xf]
    %v128 = vld [vmem:[#allocation7 + $0x54] sm:$0xf]
    %v129 = vld [vmem:[#allocation7 + $0x58] sm:$0xf]
    %v130 = vld [vmem:[#allocation7 + $0x5c] sm:$0xf]
    %v131 = vld [vmem:[#allocation7 + $0x60] sm:$0xf]
    %v132 = vld [vmem:[#allocation7 + $0x64] sm:$0xf]
    %v133 = vld [vmem:[#allocation7 + $0x68] sm:$0xf]
    %v134 = vld [vmem:[#allocation7 + $0x6c] sm:$0xf]
    %v135 = vld [vmem:[#allocation7 + $0x70] sm:$0xf]
    %v136 = vld [vmem:[#allocation7 + $0x74] sm:$0xf]
    %v137 = vld [vmem:[#allocation7 + $0x78] sm:$0xf]
    %v138 = vld [vmem:[#allocation7 + $0x7c] sm:$0xf]
    %v139 = vld [vmem:[#allocation7 + $0x80] sm:$0xf]
    %v140 = vld [vmem:[#allocation7 + $0x84] sm:$0xf]
    %v141 = vld [vmem:[#allocation7 + $0x88] sm:$0xf]
    %v142 = vld [vmem:[#allocation7 + $0x8c] sm:$0xf]
    %v143 = vld [vmem:[#allocation7 + $0x90] sm:$0xf]
    %v144 = vld [vmem:[#allocation7 + $0x94] sm:$0xf]
    %v145 = vld [vmem:[#allocation7 + $0x98] sm:$0xf]
    %v146 = vld [vmem:[#allocation7 + $0x9c] sm:$0xf]
    %v147 = vld [vmem:[#allocation7 + $0xa0] sm:$0xf]
    %v148 = vld [vmem:[#allocation7 + $0xa4] sm:$0xf]
    %v149 = vld [vmem:[#allocation7 + $0xa8] sm:$0xf]
    %v150 = vld [vmem:[#allocation7 + $0xac] sm:$0xf]
    %v151 = vld [vmem:[#allocation7 + $0xb0] sm:$0xf]
    %v152 = vld [vmem:[#allocation7 + $0xb4] sm:$0xf]
    %v153 = vld [vmem:[#allocation7 + $0xb8] sm:$0xf]
    %v154 = vld [vmem:[#allocation7 + $0xbc] sm:$0xf]
    %v155 = vld [vmem:[#allocation7 + $0xc0] sm:$0xf]
    %v156 = vld [vmem:[#allocation7 + $0xc4] sm:$0xf]
    %v157 = vld [vmem:[#allocation7 + $0xc8] sm:$0xf]
    %v158 = vld [vmem:[#allocation7 + $0xcc] sm:$0xf]
    %v159 = vld [vmem:[#allocation7 + $0xd0] sm:$0xf]
    %v160 = vld [vmem:[#allocation7 + $0xd4] sm:$0xf]
    %v161 = vld [vmem:[#allocation7 + $0xd8] sm:$0xf]
    %v162 = vld [vmem:[#allocation7 + $0xdc] sm:$0xf]
    %v163 = vld [vmem:[#allocation7 + $0xe0] sm:$0xf]
    %v164 = vld [vmem:[#allocation7 + $0xe4] sm:$0xf]
    %v165 = vld [vmem:[#allocation7 + $0xe8] sm:$0xf]
    %v166 = vld [vmem:[#allocation7 + $0xec] sm:$0xf]
    %v167 = vld [vmem:[#allocation7 + $0xf0] sm:$0xf]
    %v168 = vld [vmem:[#allocation7 + $0xf4] sm:$0xf]
    %v169 = vld [vmem:[#allocation7 + $0xf8] sm:$0xf]
    %v170 = vld [vmem:[#allocation7 + $0xfc] sm:$0xf]
    %v171 = vld [vmem:[#allocation7 + $0x100] sm:$0xf]
    %v172 = vld [vmem:[#allocation7 + $0x104] sm:$0xf]
    %v173 = vld [vmem:[#allocation7 + $0x108] sm:$0xf]
    %v174 = vld [vmem:[#allocation7 + $0x10c] sm:$0xf]
    %v175 = vld [vmem:[#allocation7 + $0x110] sm:$0xf]
    %v176 = vld [vmem:[#allocation7 + $0x114] sm:$0xf]
    %v177 = vld [vmem:[#allocation7 + $0x118] sm:$0xf]
    %v178 = vld [vmem:[#allocation7 + $0x11c] sm:$0xf]
    %v179 = vld [vmem:[#allocation7 + $0x120] sm:$0xf]
    %v180 = vld [vmem:[#allocation7 + $0x124] sm:$0xf]
    %v181 = vld [vmem:[#allocation7 + $0x128] sm:$0xf]
    %v182 = vld [vmem:[#allocation7 + $0x12c] sm:$0xf]
    %v183 = vld [vmem:[#allocation7 + $0x130] sm:$0xf]
    %v184 = vld [vmem:[#allocation7 + $0x134] sm:$0xf]
    %v185 = vld [vmem:[#allocation7 + $0x138] sm:$0xf]
    %v186 = vld [vmem:[#allocation7 + $0x13c] sm:$0xf]
    %v187 = vld [vmem:[#allocation7 + $0x140] sm:$0xf]
    %v188 = vld [vmem:[#allocation7 + $0x144] sm:$0xf]
    %v189 = vld [vmem:[#allocation7 + $0x148] sm:$0xf]
    %v190 = vld [vmem:[#allocation7 + $0x14c] sm:$0xf]
    %v191 = vld [vmem:[#allocation7 + $0x150] sm:$0xf]
    %v192 = vld [vmem:[#allocation7 + $0x154] sm:$0xf]
    %v193 = vld [vmem:[#allocation7 + $0x158] sm:$0xf]
    %v194 = vld [vmem:[#allocation7 + $0x15c] sm:$0xf]
    %v195 = vld [vmem:[#allocation7 + $0x160] sm:$0xf]
    %v196 = vld [vmem:[#allocation7 + $0x164] sm:$0xf]
    %v197 = vld [vmem:[#allocation7 + $0x168] sm:$0xf]
    %v198 = vld [vmem:[#allocation7 + $0x16c] sm:$0xf]
    %v199 = vld [vmem:[#allocation7 + $0x170] sm:$0xf]
    %v200 = vld [vmem:[#allocation7 + $0x174] sm:$0xf]
    %v201 = vld [vmem:[#allocation7 + $0x178] sm:$0xf]
    %v202 = vld [vmem:[#allocation7 + $0x17c] sm:$0xf]
    %v203 = vld [vmem:[#allocation7 + $0x180] sm:$0xf]
    %v204 = vld [vmem:[#allocation7 + $0x184] sm:$0xf]
    %v205 = vld [vmem:[#allocation7 + $0x188] sm:$0xf]
    %v206 = vld [vmem:[#allocation7 + $0x18c] sm:$0xf]
    %v207 = vld [vmem:[#allocation7 + $0x190] sm:$0xf]
    %v208 = vld [vmem:[#allocation7 + $0x194] sm:$0xf]
    %v209 = vld [vmem:[#allocation7 + $0x198] sm:$0xf]
    %v210 = vld [vmem:[#allocation7 + $0x19c] sm:$0xf]
    %v211 = vld [vmem:[#allocation7 + $0x1a0] sm:$0xf]
    %v212 = vld [vmem:[#allocation7 + $0x1a4] sm:$0xf]
    %v213 = vld [vmem:[#allocation7 + $0x1a8] sm:$0xf]
    %v214 = vld [vmem:[#allocation7 + $0x1ac] sm:$0xf]
    %v215 = vld [vmem:[#allocation7 + $0x1b0] sm:$0xf]
    %v216 = vld [vmem:[#allocation7 + $0x1b4] sm:$0xf]
    %v217 = vld [vmem:[#allocation7 + $0x1b8] sm:$0xf]
    %v218 = vld [vmem:[#allocation7 + $0x1bc] sm:$0xf]
    %v219 = vld [vmem:[#allocation7 + $0x1c0] sm:$0xf]
    %v220 = vld [vmem:[#allocation7 + $0x1c4] sm:$0xf]
    %v221 = vld [vmem:[#allocation7 + $0x1c8] sm:$0xf]
    %v222 = vld [vmem:[#allocation7 + $0x1cc] sm:$0xf]
    %v223 = vld [vmem:[#allocation7 + $0x1d0] sm:$0xf]
    %v224 = vld [vmem:[#allocation7 + $0x1d4] sm:$0xf]
    %v225 = vld [vmem:[#allocation7 + $0x1d8] sm:$0xf]
    %v226 = vld [vmem:[#allocation7 + $0x1dc] sm:$0xf]
    %v227 = vld [vmem:[#allocation7 + $0x1e0] sm:$0xf]
    %v228 = vld [vmem:[#allocation7 + $0x1e4] sm:$0xf]
    %v229 = vld [vmem:[#allocation7 + $0x1e8] sm:$0xf]
    %v230 = vld [vmem:[#allocation7 + $0x1ec] sm:$0xf]
    %v231 = vld [vmem:[#allocation7 + $0x1f0] sm:$0xf]
    %v232 = vld [vmem:[#allocation7 + $0x1f4] sm:$0xf]
    %v233 = vld [vmem:[#allocation7 + $0x1f8] sm:$0xf]
    %v234 = vld [vmem:[#allocation7 + $0x1fc] sm:$0xf]
    %v235 = vld [vmem:[%s2] sm:$0x1]
    %v237 = vlaneseq
    %v238 = vshrl.u32 %v237, 7
    %v239 = vsub.s32 0, %v238
    %v240 = vrot.slane %v235, %v239
    %v370 = vunpack.c.l.b16 %v107
    %v371 = vunpack.c.l.b16 %v108
    %v372 = vunpack.c.l.b16 %v109
    %v373 = vunpack.c.l.b16 %v110
    %v374 = vunpack.c.l.b16 %v111
    %v375 = vunpack.c.l.b16 %v112
    %v376 = vunpack.c.l.b16 %v113
    %v377 = vunpack.c.l.b16 %v114
    %v378 = vunpack.c.l.b16 %v115
    %v379 = vunpack.c.l.b16 %v116
    %v380 = vunpack.c.l.b16 %v117
    %v381 = vunpack.c.l.b16 %v118
    %v382 = vunpack.c.l.b16 %v119
    %v383 = vunpack.c.l.b16 %v120
    %v384 = vunpack.c.l.b16 %v121
    %v385 = vunpack.c.l.b16 %v122
    %v386 = vunpack.c.l.b16 %v123
    %v387 = vunpack.c.l.b16 %v124
    %v388 = vunpack.c.l.b16 %v125
    %v389 = vunpack.c.l.b16 %v126
    %v390 = vunpack.c.l.b16 %v127
    %v391 = vunpack.c.l.b16 %v128
    %v392 = vunpack.c.l.b16 %v129
    %v393 = vunpack.c.l.b16 %v130
    %v394 = vunpack.c.l.b16 %v131
    %v395 = vunpack.c.l.b16 %v132
    %v396 = vunpack.c.l.b16 %v133
    %v397 = vunpack.c.l.b16 %v134
    %v398 = vunpack.c.l.b16 %v135
    %v399 = vunpack.c.l.b16 %v136
    %v400 = vunpack.c.l.b16 %v137
    %v401 = vunpack.c.l.b16 %v138
    %v402 = vunpack.c.l.b16 %v139
    %v403 = vunpack.c.l.b16 %v140
    %v404 = vunpack.c.l.b16 %v141
    %v405 = vunpack.c.l.b16 %v142
    %v406 = vunpack.c.l.b16 %v143
    %v407 = vunpack.c.l.b16 %v144
    %v408 = vunpack.c.l.b16 %v145
    %v409 = vunpack.c.l.b16 %v146
    %v410 = vunpack.c.l.b16 %v147
    %v411 = vunpack.c.l.b16 %v148
    %v412 = vunpack.c.l.b16 %v149
    %v413 = vunpack.c.l.b16 %v150
    %v414 = vunpack.c.l.b16 %v151
    %v415 = vunpack.c.l.b16 %v152
    %v416 = vunpack.c.l.b16 %v153
    %v417 = vunpack.c.l.b16 %v154
    %v418 = vunpack.c.l.b16 %v155
    %v419 = vunpack.c.l.b16 %v156
    %v420 = vunpack.c.l.b16 %v157
    %v421 = vunpack.c.l.b16 %v158
    %v422 = vunpack.c.l.b16 %v159
    %v423 = vunpack.c.l.b16 %v160
    %v424 = vunpack.c.l.b16 %v161
    %v425 = vunpack.c.l.b16 %v162
    %v426 = vunpack.c.l.b16 %v163
    %v427 = vunpack.c.l.b16 %v164
    %v428 = vunpack.c.l.b16 %v165
    %v429 = vunpack.c.l.b16 %v166
    %v430 = vunpack.c.l.b16 %v167
    %v431 = vunpack.c.l.b16 %v168
    %v432 = vunpack.c.l.b16 %v169
    %v433 = vunpack.c.l.b16 %v170
    %v434 = vunpack.c.l.b16 %v171
    %v435 = vunpack.c.l.b16 %v172
    %v436 = vunpack.c.l.b16 %v173
    %v437 = vunpack.c.l.b16 %v174
    %v438 = vunpack.c.l.b16 %v175
    %v439 = vunpack.c.l.b16 %v176
    %v440 = vunpack.c.l.b16 %v177
    %v441 = vunpack.c.l.b16 %v178
    %v442 = vunpack.c.l.b16 %v179
    %v443 = vunpack.c.l.b16 %v180
    %v444 = vunpack.c.l.b16 %v181
    %v445 = vunpack.c.l.b16 %v182
    %v446 = vunpack.c.l.b16 %v183
    %v447 = vunpack.c.l.b16 %v184
    %v448 = vunpack.c.l.b16 %v185
    %v449 = vunpack.c.l.b16 %v186
    %v450 = vunpack.c.l.b16 %v187
    %v451 = vunpack.c.l.b16 %v188
    %v452 = vunpack.c.l.b16 %v189
    %v453 = vunpack.c.l.b16 %v190
    %v454 = vunpack.c.l.b16 %v191
    %v455 = vunpack.c.l.b16 %v192
    %v456 = vunpack.c.l.b16 %v193
    %v457 = vunpack.c.l.b16 %v194
    %v458 = vunpack.c.l.b16 %v195
    %v459 = vunpack.c.l.b16 %v196
    %v460 = vunpack.c.l.b16 %v197
    %v461 = vunpack.c.l.b16 %v198
    %v462 = vunpack.c.l.b16 %v199
    %v463 = vunpack.c.l.b16 %v200
    %v464 = vunpack.c.l.b16 %v201
    %v465 = vunpack.c.l.b16 %v202
    %v466 = vunpack.c.l.b16 %v203
    %v467 = vunpack.c.l.b16 %v204
    %v468 = vunpack.c.l.b16 %v205
    %v469 = vunpack.c.l.b16 %v206
    %v470 = vunpack.c.l.b16 %v207
    %v471 = vunpack.c.l.b16 %v208
    %v472 = vunpack.c.l.b16 %v209
    %v473 = vunpack.c.l.b16 %v210
    %v474 = vunpack.c.l.b16 %v211
    %v475 = vunpack.c.l.b16 %v212
    %v476 = vunpack.c.l.b16 %v213
    %v477 = vunpack.c.l.b16 %v214
    %v478 = vunpack.c.l.b16 %v215
    %v479 = vunpack.c.l.b16 %v216
    %v480 = vunpack.c.l.b16 %v217
    %v481 = vunpack.c.l.b16 %v218
    %v482 = vunpack.c.l.b16 %v219
    %v483 = vunpack.c.l.b16 %v220
    %v484 = vunpack.c.l.b16 %v221
    %v485 = vunpack.c.l.b16 %v222
    %v486 = vunpack.c.l.b16 %v223
    %v487 = vunpack.c.l.b16 %v224
    %v488 = vunpack.c.l.b16 %v225
    %v489 = vunpack.c.l.b16 %v226
    %v490 = vunpack.c.l.b16 %v227
    %v491 = vunpack.c.l.b16 %v228
    %v492 = vunpack.c.l.b16 %v229
    %v493 = vunpack.c.l.b16 %v230
    %v494 = vunpack.c.l.b16 %v231
    %v495 = vunpack.c.l.b16 %v232
    %v496 = vunpack.c.l.b16 %v233
    %v497 = vunpack.c.l.b16 %v234
    %v498 = vpack.c.b16 %v371, %v370
    %v499 = vpack.c.b16 %v373, %v372
    %v500 = vpack.c.b16 %v375, %v374
    %v501 = vpack.c.b16 %v377, %v376
    %v502 = vpack.c.b16 %v379, %v378
    %v503 = vpack.c.b16 %v381, %v380
    %v504 = vpack.c.b16 %v383, %v382
    %v505 = vpack.c.b16 %v385, %v384
    %v506 = vpack.c.b16 %v387, %v386
    %v507 = vpack.c.b16 %v389, %v388
    %v508 = vpack.c.b16 %v391, %v390
    %v509 = vpack.c.b16 %v393, %v392
    %v510 = vpack.c.b16 %v395, %v394
    %v511 = vpack.c.b16 %v397, %v396
    %v512 = vpack.c.b16 %v399, %v398
    %v513 = vpack.c.b16 %v401, %v400
    %v514 = vpack.c.b16 %v403, %v402
    %v515 = vpack.c.b16 %v405, %v404
    %v516 = vpack.c.b16 %v407, %v406
    %v517 = vpack.c.b16 %v409, %v408
    %v518 = vpack.c.b16 %v411, %v410
    %v519 = vpack.c.b16 %v413, %v412
    %v520 = vpack.c.b16 %v415, %v414
    %v521 = vpack.c.b16 %v417, %v416
    %v522 = vpack.c.b16 %v419, %v418
    %v523 = vpack.c.b16 %v421, %v420
    %v524 = vpack.c.b16 %v423, %v422
    %v525 = vpack.c.b16 %v425, %v424
    %v526 = vpack.c.b16 %v427, %v426
    %v527 = vpack.c.b16 %v429, %v428
    %v528 = vpack.c.b16 %v431, %v430
    %v529 = vpack.c.b16 %v433, %v432
    %v530 = vpack.c.b16 %v435, %v434
    %v531 = vpack.c.b16 %v437, %v436
    %v532 = vpack.c.b16 %v439, %v438
    %v533 = vpack.c.b16 %v441, %v440
    %v534 = vpack.c.b16 %v443, %v442
    %v535 = vpack.c.b16 %v445, %v444
    %v536 = vpack.c.b16 %v447, %v446
    %v537 = vpack.c.b16 %v449, %v448
    %v538 = vpack.c.b16 %v451, %v450
    %v539 = vpack.c.b16 %v453, %v452
    %v540 = vpack.c.b16 %v455, %v454
    %v541 = vpack.c.b16 %v457, %v456
    %v542 = vpack.c.b16 %v459, %v458
    %v543 = vpack.c.b16 %v461, %v460
    %v544 = vpack.c.b16 %v463, %v462
    %v545 = vpack.c.b16 %v465, %v464
    %v546 = vpack.c.b16 %v467, %v466
    %v547 = vpack.c.b16 %v469, %v468
    %v548 = vpack.c.b16 %v471, %v470
    %v549 = vpack.c.b16 %v473, %v472
    %v550 = vpack.c.b16 %v475, %v474
    %v551 = vpack.c.b16 %v477, %v476
    %v552 = vpack.c.b16 %v479, %v478
    %v553 = vpack.c.b16 %v481, %v480
    %v554 = vpack.c.b16 %v483, %v482
    %v555 = vpack.c.b16 %v485, %v484
    %v556 = vpack.c.b16 %v487, %v486
    %v557 = vpack.c.b16 %v489, %v488
    %v558 = vpack.c.b16 %v491, %v490
    %v559 = vpack.c.b16 %v493, %v492
    %v560 = vpack.c.b16 %v495, %v494
    %v561 = vpack.c.b16 %v497, %v496
    %626 = vmatprep.subr.bf16.mxu0 0
    %627 = vmatpush1.bf16.msra.mxu0 %v505
    %628 = vmatprep.subr.bf16.mxu0 0
    %629 = vmatpush1.bf16.msra.mxu0 %v504
    %630 = vmatprep.subr.bf16.mxu0 0
    %631 = vmatpush1.bf16.msra.mxu0 %v503
    %632 = vmatprep.subr.bf16.mxu0 0
    %633 = vmatpush1.bf16.msra.mxu0 %v502
    %634 = vmatprep.subr.bf16.mxu0 0
    %635 = vmatpush1.bf16.msra.mxu0 %v501
    %636 = vmatprep.subr.bf16.mxu0 0
    %637 = vmatpush1.bf16.msra.mxu0 %v500
    %638 = vmatprep.subr.bf16.mxu0 0
    %639 = vmatpush1.bf16.msra.mxu0 %v499
    %640 = vmatprep.subr.bf16.mxu0 0
    %641 = vmatpush1.bf16.msra.mxu0 %v498
    %642 = vmatprep.subr.bf16.mxu0 0
    %643 = vmatpush2.bf16.msra.mxu0 %v513
    %644 = vmatprep.subr.bf16.mxu0 0
    %645 = vmatpush2.bf16.msra.mxu0 %v512
    %646 = vmatprep.subr.bf16.mxu0 0
    %647 = vmatpush2.bf16.msra.mxu0 %v511
    %648 = vmatprep.subr.bf16.mxu0 0
    %649 = vmatpush2.bf16.msra.mxu0 %v510
    %650 = vmatprep.subr.bf16.mxu0 0
    %651 = vmatpush2.bf16.msra.mxu0 %v509
    %652 = vmatprep.subr.bf16.mxu0 0
    %653 = vmatpush2.bf16.msra.mxu0 %v508
    %654 = vmatprep.subr.bf16.mxu0 0
    %655 = vmatpush2.bf16.msra.mxu0 %v507
    %656 = vmatprep.subr.bf16.mxu0 0
    %657 = vmatpush2.bf16.msra.mxu0 %v506
    %658 = vmatprep.mubr.bf16.mxu0 %v100
    %659 = vmatmul.mubr.bf16.gmra.mxu0 %v99
    %v660 = vpop.f32.mrf.mxu0
    %v661 = vadd.f32 %v240, %v660
    %v662 = vpop.f32.mrf.mxu0
    %v663 = vpop.f32.mrf.mxu0
    %v664 = vpop.f32.mrf.mxu0
    %665 = vdwg.mxu0
    %666 = vmatprep.subr.bf16.mxu0 0
    %667 = vmatpush1.bf16.msra.mxu0 %v521
    %668 = vmatprep.subr.bf16.mxu0 0
    %669 = vmatpush1.bf16.msra.mxu0 %v520
    %670 = vmatprep.subr.bf16.mxu0 0
    %671 = vmatpush1.bf16.msra.mxu0 %v519
    %672 = vmatprep.subr.bf16.mxu0 0
    %673 = vmatpush1.bf16.msra.mxu0 %v518
    %674 = vmatprep.subr.bf16.mxu0 0
    %675 = vmatpush1.bf16.msra.mxu0 %v517
    %676 = vmatprep.subr.bf16.mxu0 0
    %677 = vmatpush1.bf16.msra.mxu0 %v516
    %678 = vmatprep.subr.bf16.mxu0 0
    %679 = vmatpush1.bf16.msra.mxu0 %v515
    %680 = vmatprep.subr.bf16.mxu0 0
    %681 = vmatpush1.bf16.msra.mxu0 %v514
    %682 = vmatprep.subr.bf16.mxu0 0
    %683 = vmatpush2.bf16.msra.mxu0 %v529
    %684 = vmatprep.subr.bf16.mxu0 0
    %685 = vmatpush2.bf16.msra.mxu0 %v528
    %686 = vmatprep.subr.bf16.mxu0 0
    %687 = vmatpush2.bf16.msra.mxu0 %v527
    %688 = vmatprep.subr.bf16.mxu0 0
    %689 = vmatpush2.bf16.msra.mxu0 %v526
    %690 = vmatprep.subr.bf16.mxu0 0
    %691 = vmatpush2.bf16.msra.mxu0 %v525
    %692 = vmatprep.subr.bf16.mxu0 0
    %693 = vmatpush2.bf16.msra.mxu0 %v524
    %694 = vmatprep.subr.bf16.mxu0 0
    %695 = vmatpush2.bf16.msra.mxu0 %v523
    %696 = vmatprep.subr.bf16.mxu0 0
    %697 = vmatpush2.bf16.msra.mxu0 %v522
    %698 = vmatprep.mubr.bf16.mxu0 %v102
    %699 = vmatmul.mubr.bf16.gmra.mxu0 %v101
    %v700 = vpop.f32.mrf.mxu0
    %v701 = vadd.f32 %v661, %v700
    %v702 = vpop.f32.mrf.mxu0
    %v703 = vpop.f32.mrf.mxu0
    %v704 = vpop.f32.mrf.mxu0
    %705 = vdwg.mxu0
    %706 = vmatprep.subr.bf16.mxu0 0
    %707 = vmatpush1.bf16.msra.mxu0 %v537
    %708 = vmatprep.subr.bf16.mxu0 0
    %709 = vmatpush1.bf16.msra.mxu0 %v536
    %710 = vmatprep.subr.bf16.mxu0 0
    %711 = vmatpush1.bf16.msra.mxu0 %v535
    %712 = vmatprep.subr.bf16.mxu0 0
    %713 = vmatpush1.bf16.msra.mxu0 %v534
    %714 = vmatprep.subr.bf16.mxu0 0
    %715 = vmatpush1.bf16.msra.mxu0 %v533
    %716 = vmatprep.subr.bf16.mxu0 0
    %717 = vmatpush1.bf16.msra.mxu0 %v532
    %718 = vmatprep.subr.bf16.mxu0 0
    %719 = vmatpush1.bf16.msra.mxu0 %v531
    %720 = vmatprep.subr.bf16.mxu0 0
    %721 = vmatpush1.bf16.msra.mxu0 %v530
    %722 = vmatprep.subr.bf16.mxu0 0
    %723 = vmatpush2.bf16.msra.mxu0 %v545
    %724 = vmatprep.subr.bf16.mxu0 0
    %725 = vmatpush2.bf16.msra.mxu0 %v544
    %726 = vmatprep.subr.bf16.mxu0 0
    %727 = vmatpush2.bf16.msra.mxu0 %v543
    %728 = vmatprep.subr.bf16.mxu0 0
    %729 = vmatpush2.bf16.msra.mxu0 %v542
    %730 = vmatprep.subr.bf16.mxu0 0
    %731 = vmatpush2.bf16.msra.mxu0 %v541
    %732 = vmatprep.subr.bf16.mxu0 0
    %733 = vmatpush2.bf16.msra.mxu0 %v540
    %734 = vmatprep.subr.bf16.mxu0 0
    %735 = vmatpush2.bf16.msra.mxu0 %v539
    %736 = vmatprep.subr.bf16.mxu0 0
    %737 = vmatpush2.bf16.msra.mxu0 %v538
    %738 = vmatprep.mubr.bf16.mxu0 %v104
    %739 = vmatmul.mubr.bf16.gmra.mxu0 %v103
    %v740 = vpop.f32.mrf.mxu0
    %v741 = vadd.f32 %v701, %v740
    %v742 = vpop.f32.mrf.mxu0
    %v743 = vpop.f32.mrf.mxu0
    %v744 = vpop.f32.mrf.mxu0
    %745 = vdwg.mxu0
    %746 = vmatprep.subr.bf16.mxu0 0
    %747 = vmatpush1.bf16.msra.mxu0 %v553
    %748 = vmatprep.subr.bf16.mxu0 0
    %749 = vmatpush1.bf16.msra.mxu0 %v552
    %750 = vmatprep.subr.bf16.mxu0 0
    %751 = vmatpush1.bf16.msra.mxu0 %v551
    %752 = vmatprep.subr.bf16.mxu0 0
    %753 = vmatpush1.bf16.msra.mxu0 %v550
    %754 = vmatprep.subr.bf16.mxu0 0
    %755 = vmatpush1.bf16.msra.mxu0 %v549
    %756 = vmatprep.subr.bf16.mxu0 0
    %757 = vmatpush1.bf16.msra.mxu0 %v548
    %758 = vmatprep.subr.bf16.mxu0 0
    %759 = vmatpush1.bf16.msra.mxu0 %v547
    %760 = vmatprep.subr.bf16.mxu0 0
    %761 = vmatpush1.bf16.msra.mxu0 %v546
    %762 = vmatprep.subr.bf16.mxu0 0
    %763 = vmatpush2.bf16.msra.mxu0 %v561
    %764 = vmatprep.subr.bf16.mxu0 0
    %765 = vmatpush2.bf16.msra.mxu0 %v560
    %766 = vmatprep.subr.bf16.mxu0 0
    %767 = vmatpush2.bf16.msra.mxu0 %v559
    %768 = vmatprep.subr.bf16.mxu0 0
    %769 = vmatpush2.bf16.msra.mxu0 %v558
    %770 = vmatprep.subr.bf16.mxu0 0
    %771 = vmatpush2.bf16.msra.mxu0 %v557
    %772 = vmatprep.subr.bf16.mxu0 0
    %773 = vmatpush2.bf16.msra.mxu0 %v556
    %774 = vmatprep.subr.bf16.mxu0 0
    %775 = vmatpush2.bf16.msra.mxu0 %v555
    %776 = vmatprep.subr.bf16.mxu0 0
    %777 = vmatpush2.bf16.msra.mxu0 %v554
    %778 = vmatprep.mubr.bf16.mxu0 %v106
    %779 = vmatmul.mubr.bf16.gmra.mxu0 %v105
    %v780 = vpop.f32.mrf.mxu0
    %v781 = vadd.f32 %v741, %v780
    %v782 = vpop.f32.mrf.mxu0
    %v783 = vpop.f32.mrf.mxu0
    %v784 = vpop.f32.mrf.mxu0
    %785 = vdwg.mxu0
    %v786 = vmax.f32 %v781, 0.0
    %v787 = vld [vmem:[%s3] sm:$0x1]
    %v789 = vlaneseq
    %v790 = vshrl.u32 %v789, 7
    %v791 = vsub.s32 0, %v790
    %v792 = vrot.slane %v787, %v791
    %v794 = vmul.f32 %v786, %v792
    %vm795 = vcmask 1041408
    %v796 = vsel %vm795, %v794, 0.0
    %797 = vadd.xlane.f32.xlu0 %v796
    %v798 = vpop.xlane.xlu0 %797
    %s799 = sld [smem:[#allocation2]]
    %v800 = vstv %s799
    %v801 = vadd.f32 %v798, %v800
    %v802 = vxor.u32 %v801, 2147483648
    %v803 = vmul.f32 %v802, 1.442695
    %v804 = vpow.pop %v803
    %v805 = vadd.f32 %v804, 1.0
    %v806 = vrcp.pop %v805
    %v807 = vmul.f32 1.0, %v806
    %s808 = smul.u32 0, 2
    %v809 = vlaneseq
    %v810 = vand.u32 %v809, 127
    %v811 = vstv %s808
    %v812 = vadd.s32 %v811, %v810
    %s813 = sld [smem:[#allocation3]]
    %v814 = vstv %s813
    %vm815 = vcmp.lt.s32.totalorder %v812, %v814
    %v817 = vlaneseq
    %v818 = vshrl.u32 %v817, 7
    %v819 = vsub.s32 %v810, %v818
    %v820 = vrot.slane %v807, %v819
    %v822 = vsel %vm815, %v820, 0.0
    %vm823 = vcmask 8192
    %824 = vst.msk [vmem:[#allocation9] sm:$0x1] %vm823, %v822
    // Predicated region
    $region34: #{tpu_custom_call.1} parent=1 // pred_check
      _
    $region35: #{tpu_custom_call.1} parent=1 // pred_check_branch
      %826 = sbr.rel (0) target = $region37
    $region36: #{tpu_custom_call.1} parent=1 // pred_region
      %s828 = ssub.s32 16, 16
      %829 = vsyncadd [#allocation6], %s828
      %s831 = sshll.u32 [#allocation9], 4
      %s832 = int_to_ptr.vmem [resolvable:$true] %s831
      %834 = dma.vmem_to_hbm [thread:$0]  %s832, 16, %s6, [#allocation6]
    $region37: #{tpu_custom_call.1} parent=1 // pred_fallthru
      _
    // Predicated region
    $region38: #{tpu_custom_call.1} parent=1 // pred_check
      _
    $region39: #{tpu_custom_call.1} parent=1 // pred_check_branch
      %836 = sbr.rel (0) target = $region41
    $region40: #{tpu_custom_call.1} parent=1 // pred_region
      %837 = dma.done [#allocation6], 16
    $region41: #{tpu_custom_call.1} parent=1 // pred_fallthru
      _
    %838 = vsyncpa [#allocation5], 1
    %839 = vsyncpa [#allocation8], 1
    %840 = vsyncpa [#allocation6], 1

</llo_original>
